<compile_context>
chip_gen: v5e
topology: v5e:2x2
jax: 0.10.0
libtpu: 0.0.40
codegen_flags: <defaults>
</compile_context>

<pallas_src>
import math
import numpy as np
import jax
import jax.numpy as jnp
from jax.experimental import pallas as pl
from jax.experimental.pallas import tpu as pltpu


# ----------------------------------------------------------------------------
# Index generation (deterministic port of _gen_indx_seqs, numpy only, seeded).
# Runs once on the host at module-construction time -- not part of the forward.
# ----------------------------------------------------------------------------
def gen_indx_seqs(fan_in: int, num_out: int, num_in: int,
                  fan_out_const: bool, seed: int = 0) -> np.ndarray:
    rng = np.random.default_rng(seed)
    indx_seqs = np.zeros((num_out, fan_in), dtype=np.int64)
    v_inds = np.arange(num_in)
    probs = 1.0 / num_in * np.ones(num_in)
    for row_nr in range(num_out):
        chosen_inds = rng.choice(
            v_inds, size=fan_in, replace=False, p=probs / probs.sum())
        chosen_inds.sort()
        if fan_out_const:
            probs[chosen_inds] /= 100 * num_in
        indx_seqs[row_nr, :] = chosen_inds
    return indx_seqs.astype(np.int32)


def _round_up(x: int, m: int) -> int:
    return (x + m - 1) // m * m


# ----------------------------------------------------------------------------
# Tile selection for the (In, Out) dense weight.  Depends only on the layer
# shape, so prepare_weights() and the forward recompute the same values.
# ----------------------------------------------------------------------------
_RESIDENT_WEIGHT_BYTES = 8 * 1024 * 1024   # keep whole weight in VMEM if small


def _select_oi_tiles(in_features: int, out_features: int, op_bytes: int):
    inp128 = _round_up(in_features, 128)
    outp128 = _round_up(out_features, 128)
    if inp128 * outp128 * op_bytes <= _RESIDENT_WEIGHT_BYTES:
        # Small dense weight: single (j,k) grid step, weight streamed once and
        # kept VMEM-resident across the whole batch.
        tk, tn = inp128, outp128
    else:
        # 256-multiple tiles keep the v6e/v7x 256-wide MXU fully fed.
        tn = min(512, outp128)
        tk = min(1024, inp128)
    inp = _round_up(in_features, tk)
    outp = _round_up(out_features, tn)
    return tk, tn, inp, outp


# ----------------------------------------------------------------------------
# One-shot, x-independent weight preparation (cache the result!).
#   * scatter the condensed weight into a dense (In, Out) matrix (pre-
#     transposed so the forward needs no in-kernel transpose),
#   * zero-pad to tile multiples,
#   * cast to the MXU operand dtype (bf16 by default).
# Duplicate indices (impossible here since replace=False) would still sum,
# matching sum_f weight[o, f] * x[b, idx[o, f]] exactly.
# TODO(synk): for training loops with frequent weight updates, replace the
# scatter-add with a one-hot / segment-sum densification or host-side prep.
# ----------------------------------------------------------------------------
def prepare_weights(weight, indx_seqs, bias, in_features: int,
                    *, op_dtype=jnp.bfloat16):
    out_features, fan_in = weight.shape
    op_bytes = jnp.dtype(op_dtype).itemsize
    tk, tn, inp, outp = _select_oi_tiles(in_features, out_features, op_bytes)

    out_idx = jnp.broadcast_to(
        jnp.arange(out_features, dtype=jnp.int32)[:, None],
        (out_features, fan_in))
    w_dense_t = jnp.zeros((in_features, out_features), weight.dtype)
    w_dense_t = w_dense_t.at[indx_seqs, out_idx].add(weight)       # (In, Out)

    w_p = jnp.zeros((inp, outp), op_dtype)
    w_p = w_p.at[:in_features, :out_features].set(w_dense_t.astype(op_dtype))
    b_p = jnp.zeros((1, outp), jnp.float32)
    b_p = b_p.at[0, :out_features].set(bias.astype(jnp.float32))
    return w_p, b_p


# ----------------------------------------------------------------------------
# Hot-path Pallas kernel: tiled matmul, f32 accumulation directly into the
# resident output block; bias folded into the k==0 partial (no zero-fill, no
# epilogue copy, no scratch accumulator).
# grid = (B/tb, Out/tn, In/tk);  In (axis 2) is the reduction axis.
# ----------------------------------------------------------------------------
def _matmul_bias_kernel(x_ref, w_ref, b_ref, o_ref):
    k = pl.program_id(2)
    prod = jnp.dot(x_ref[...], w_ref[...],
                   preferred_element_type=jnp.float32)

    @pl.when(k == 0)
    def _():
        o_ref[...] = b_ref[...] + prod          # bias added exactly once

    @pl.when(k > 0)
    def _():
        o_ref[...] += prod


def linear_condensed_forward(x, w_p, b_p, *, in_features: int,
                             out_features: int, tile_b: int = 256,
                             weight_buffers: int = 2):
    """Hot path. x: (B, In); w_p: (Inp, Outp) padded dense-T weight (operand
    dtype); b_p: (1, Outp) f32 padded bias  ->  (B, Out) f32."""
    B = x.shape[0]
    op_dtype = w_p.dtype
    op_bytes = jnp.dtype(op_dtype).itemsize
    tk, tn, inp, outp = _select_oi_tiles(in_features, out_features, op_bytes)
    assert w_p.shape == (inp, outp) and b_p.shape == (1, outp)

    tb = min(tile_b, _round_up(B, 8))
    bp = _round_up(B, tb)

    # Cast BEFORE padding (halves the pad pass); skip the pad when aligned.
    x_op = x.astype(op_dtype)
    if (bp, inp) != (B, in_features):
        x_op = jnp.pad(x_op, ((0, bp - B), (0, inp - in_features)))

    grid = (bp // tb, outp // tn, inp // tk)

    w_spec_kwargs = {}
    if weight_buffers != 2:
        # Deeper weight pipelining if DMA is still exposed after tile sizing.
        w_spec_kwargs["pipeline_mode"] = pl.Buffered(weight_buffers)

    # Generation-aware VMEM request: actual footprint (double-buffered x, out;
    # weight buffers; bias) with headroom, capped at 48 MiB (safe on v7x's
    # 64 MiB physical VMEM as well as v5e/v6e's 128 MiB).
    footprint = (2 * tb * tk * op_bytes
                 + max(weight_buffers, 2) * tk * tn * op_bytes
                 + 2 * tb * tn * 4
                 + 2 * tn * 4)
    vmem_limit = int(min(max(2 * footprint, 32 << 20), 48 << 20))

    out_p = pl.pallas_call(
        _matmul_bias_kernel,
        out_shape=jax.ShapeDtypeStruct((bp, outp), jnp.float32),
        grid=grid,
        in_specs=[
            pl.BlockSpec((tb, tk), lambda i, j, k: (i, k)),              # x
            pl.BlockSpec((tk, tn), lambda i, j, k: (k, j),               # W^T
                         **w_spec_kwargs),
            pl.BlockSpec((1, tn), lambda i, j, k: (0, j)),               # bias
        ],
        out_specs=pl.BlockSpec((tb, tn), lambda i, j, k: (i, j)),
        compiler_params=pltpu.CompilerParams(
            dimension_semantics=("parallel", "parallel", "arbitrary"),
            vmem_limit_bytes=vmem_limit),
    )(x_op, w_p, b_p)

    return out_p[:B, :out_features]


# Convenience wrapper matching the original module call signature (does the
# one-shot prep inline; prefer prepare_weights + linear_condensed_forward and
# cache the prepared weights between calls).
def linear_condensed(x, weight, indx_seqs, bias, *, use_bf16: bool = True):
    in_features = x.shape[-1]
    out_features = weight.shape[0]
    op_dtype = jnp.bfloat16 if use_bf16 else jnp.float32
    w_p, b_p = prepare_weights(weight, indx_seqs, bias, in_features,
                               op_dtype=op_dtype)
    return linear_condensed_forward(x, w_p, b_p, in_features=in_features,
                                    out_features=out_features)


# ----------------------------------------------------------------------------
# Main (correctness smoke test at small shapes)
# ----------------------------------------------------------------------------
if __name__ == "__main__":
    in_features = 32
    out_features = 16
    fan_in = 8
    batch = 8
    fan_out_const = True

    key = jax.random.PRNGKey(0)
    k_x, k_w, k_b = jax.random.split(key, 3)

    # Parameter init matching the PyTorch module's reset_parameters():
    #   weight ~ U(-sqrt(1/fan_in), sqrt(1/fan_in))   (kaiming_uniform a=sqrt(5))
    #   bias   ~ U(-1/sqrt(fan_in), 1/sqrt(fan_in))
    w_bound = math.sqrt(1.0 / fan_in)
    weight = jax.random.uniform(k_w, (out_features, fan_in), jnp.float32,
                                minval=-w_bound, maxval=w_bound)
    b_bound = 1.0 / math.sqrt(fan_in)
    bias = jax.random.uniform(k_b, (out_features,), jnp.float32,
                              minval=-b_bound, maxval=b_bound)

    indx_seqs = jnp.asarray(
        gen_indx_seqs(fan_in=fan_in, num_out=out_features,
                      num_in=in_features, fan_out_const=fan_out_const, seed=0))

    x = jax.random.normal(k_x, (batch, in_features), jnp.float32)

    # Pure-JAX reference of the exact PyTorch forward semantics.
    ref = jnp.sum(weight[None, :, :] * x[:, indx_seqs], axis=2) + bias[None, :]

    # --- default bf16-operand path (f32 accumulation), prep hoisted/cached ---
    w_p_bf16, b_p = prepare_weights(weight, indx_seqs, bias, in_features,
                                    op_dtype=jnp.bfloat16)
    out_bf16 = linear_condensed_forward(
        x, w_p_bf16, b_p, in_features=in_features, out_features=out_features)
    out_bf16 = jax.block_until_ready(out_bf16)
    assert out_bf16.shape == (batch, out_features)
    assert np.allclose(np.asarray(out_bf16), np.asarray(ref),
                       rtol=3e-2, atol=3e-2)

    # --- f32-operand path (tight tolerance) ---
    w_p_f32, b_p_f32 = prepare_weights(weight, indx_seqs, bias, in_features,
                                       op_dtype=jnp.float32)
    out_f32 = linear_condensed_forward(
        x, w_p_f32, b_p_f32, in_features=in_features,
        out_features=out_features)
    out_f32 = jax.block_until_ready(out_f32)
    assert np.allclose(np.asarray(out_f32), np.asarray(ref),
                       rtol=1e-5, atol=1e-5)

    print("KERNEL_OK")
</pallas_src>

<mosaic_0001>
module attributes {stable_mosaic.version = 11 : i64} {
  func.func @_matmul_bias_kernel(%arg0: i32, %arg1: i32, %arg2: i32, %arg3: memref<8x128xbf16, #tpu.memory_space<vmem>>, %arg4: memref<128x128xbf16, #tpu.memory_space<vmem>>, %arg5: memref<1x128xf32, #tpu.memory_space<vmem>>, %arg6: memref<8x128xf32, #tpu.memory_space<vmem>>) attributes {dimension_semantics = [#tpu.dimension_semantics<parallel>, #tpu.dimension_semantics<parallel>, #tpu.dimension_semantics<arbitrary>], iteration_bounds = array<i64: 1, 1, 1>, scalar_prefetch = 0 : i64, scratch_operands = 0 : i64, tpu.core_type = #tpu.core_type<tc>, window_params = [{transform_indices = @transform_0, window_bounds = array<i64: 8, 128>}, {transform_indices = @transform_1, window_bounds = array<i64: 128, 128>}, {transform_indices = @transform_2, window_bounds = array<i64: 1, 128>}, {transform_indices = @transform_3, window_bounds = array<i64: 8, 128>}]} {
    %c0 = arith.constant 0 : index
    %c0_0 = arith.constant 0 : index
    %0 = vector.load %arg3[%c0, %c0_0] : memref<8x128xbf16, #tpu.memory_space<vmem>>, vector<8x128xbf16>
    %c0_1 = arith.constant 0 : index
    %c0_2 = arith.constant 0 : index
    %1 = vector.load %arg4[%c0_1, %c0_2] : memref<128x128xbf16, #tpu.memory_space<vmem>>, vector<128x128xbf16>
    %cst = arith.constant dense<0.000000e+00> : vector<8x128xf32>
    %2 = tpu.matmul %0, %1, %cst {dimension_numbers = #tpu.dot_dimension_numbers<[1], [0], [0], [1], [0, 0, 1, 1], [], []>} : vector<8x128xbf16>, vector<128x128xbf16>, vector<8x128xf32> -> vector<8x128xf32>
    %c0_i32 = arith.constant 0 : i32
    %3 = arith.cmpi eq, %arg2, %c0_i32 : i32
    %4 = arith.extui %3 : i1 to i32
    %c0_i32_3 = arith.constant 0 : i32
    %5 = arith.cmpi ne, %4, %c0_i32_3 : i32
    scf.if %5 {
      %c0_6 = arith.constant 0 : index
      %c0_7 = arith.constant 0 : index
      %9 = vector.load %arg5[%c0_6, %c0_7] : memref<1x128xf32, #tpu.memory_space<vmem>>, vector<1x128xf32>
      %10 = vector.broadcast %9 : vector<1x128xf32> to vector<8x128xf32>
      %11 = arith.addf %10, %2 : vector<8x128xf32>
      %c0_8 = arith.constant 0 : index
      %c0_9 = arith.constant 0 : index
      %12 = vector.load %arg6[%c0_8, %c0_9] : memref<8x128xf32, #tpu.memory_space<vmem>>, vector<8x128xf32>
      tpu.vector_store %arg6[%c0_8, %c0_9], %11 {strides = array<i32>} : memref<8x128xf32, #tpu.memory_space<vmem>>, vector<8x128xf32>,
    } else {
    }
    %c0_i32_4 = arith.constant 0 : i32
    %6 = arith.cmpi sgt, %arg2, %c0_i32_4 : i32
    %7 = arith.extui %6 : i1 to i32
    %c0_i32_5 = arith.constant 0 : i32
    %8 = arith.cmpi ne, %7, %c0_i32_5 : i32
    scf.if %8 {
      %c0_6 = arith.constant 0 : index
      %c0_7 = arith.constant 0 : index
      %9 = vector.load %arg6[%c0_6, %c0_7] : memref<8x128xf32, #tpu.memory_space<vmem>>, vector<8x128xf32>
      %10 = arith.addf %9, %2 : vector<8x128xf32>
      %c0_8 = arith.constant 0 : index
      %c0_9 = arith.constant 0 : index
      %11 = vector.load %arg6[%c0_8, %c0_9] : memref<8x128xf32, #tpu.memory_space<vmem>>, vector<8x128xf32>
      tpu.vector_store %arg6[%c0_8, %c0_9], %10 {strides = array<i32>} : memref<8x128xf32, #tpu.memory_space<vmem>>, vector<8x128xf32>,
    } else {
    }
    return
  }
  func.func @transform_0(%arg0: i32, %arg1: i32, %arg2: i32) -> (i32, i32) {
    %c0_i32 = arith.constant 0 : i32
    return %arg0, %arg2 : i32, i32
  }
  func.func @transform_1(%arg0: i32, %arg1: i32, %arg2: i32) -> (i32, i32) {
    %c0_i32 = arith.constant 0 : i32
    return %arg2, %arg1 : i32, i32
  }
  func.func @transform_2(%arg0: i32, %arg1: i32, %arg2: i32) -> (i32, i32) {
    %c0_i32 = arith.constant 0 : i32
    %c0_i32_0 = arith.constant 0 : i32
    return %c0_i32, %arg1 : i32, i32
  }
  func.func @transform_3(%arg0: i32, %arg1: i32, %arg2: i32) -> (i32, i32) {
    %c0_i32 = arith.constant 0 : i32
    return %arg0, %arg1 : i32, i32
  }
}

</mosaic_0001>

<llo_original>
// kernel: tpu_custom_call.1
$region0: #{tpu_custom_call.1}
  #allocation0 [shape = 'u32[]', space=smem, size = 0x4, offset = 0x4, fixed_abs, tag = 'smem constant byte address 0x4 - core index']
  #allocation1 [shape = 'u32[72,128]{1,0:T(1,128)}', space=vmem, size = 0x9000, scoped, tag = 'internal scratch']
  %s0 = inlined_call_operand.hbm [shape: bf16[8,128], index: 0, kind: input, shape index: {}]
  %s1 = inlined_call_operand.hbm [shape: bf16[128,128], index: 1, kind: input, shape index: {}]
  %s2 = inlined_call_operand.vmem [shape: f32[1,128], index: 2, kind: input, shape index: {}]
  %s3 = inlined_call_operand.hbm [shape: f32[8,128], index: 3, kind: output, shape index: {}]
  %s4 = sld [smem:[#allocation0]]
  $region38: #{tpu_custom_call.1} parent=0
    _
  %s6 = ssub.s32 1, %s4
  %s7 = scalar_select 0, %s6, %s4
  $region1: #{tpu_custom_call.1} parent=0
    #allocation2 [shape = 'u8[2048]{0}', space=vmem, size = 0x800, scoped, tag = 'input window, operand 0, single buffered']
    #allocation3 [shape = 's32[1]{0}', space=sflag, size = 0x4, scoped, tag = 'scoped memory for tpu_custom_call.1']
    #allocation4 [shape = 's32[1]{0}', space=sflag, size = 0x4, scoped, tag = 'scoped memory for tpu_custom_call.1']
    #allocation5 [shape = 'u8[32768]{0}', space=vmem, size = 0x8000, scoped, tag = 'input window, operand 1, single buffered']
    #allocation6 [shape = 's32[1]{0}', space=sflag, size = 0x4, scoped, tag = 'scoped memory for tpu_custom_call.1']
    #allocation7 [shape = 'u8[4096]{0}', space=vmem, size = 0x1000, scoped, tag = 'output window, operand 0, single buffered']
    %8 = vsyncpa [#allocation3], 0
    %9 = vsyncpa [#allocation6], 0
    %10 = vsyncpa [#allocation4], 0
    // Predicated region
    $region2: #{tpu_custom_call.1} parent=1 // pred_check
      _
    $region3: #{tpu_custom_call.1} parent=1 // pred_check_branch
      %12 = sbr.rel (0) target = $region5
    $region4: #{tpu_custom_call.1} parent=1 // pred_region
      %14 = vsyncadd [#allocation3], 0
      %s16 = sshll.u32 %s0, 4
      %s17 = int_to_ptr.hbm [resolvable:$true] %s16
      %s18 = sshll.u32 [#allocation2], 4
      %s19 = int_to_ptr.vmem [resolvable:$true] %s18
      %21 = dma.hbm_to_vmem [thread:$0]  %s17, 64, %s19, [#allocation3]
    $region5: #{tpu_custom_call.1} parent=1 // pred_fallthru
      _
    // Predicated region
    $region6: #{tpu_custom_call.1} parent=1 // pred_check
      _
    $region7: #{tpu_custom_call.1} parent=1 // pred_check_branch
      %23 = sbr.rel (0) target = $region9
    $region8: #{tpu_custom_call.1} parent=1 // pred_region
      %25 = vsyncadd [#allocation6], 0
      %s26 = sshll.u32 %s1, 4
      %s27 = int_to_ptr.hbm [resolvable:$true] %s26
      %s28 = sshll.u32 [#allocation5], 4
      %s29 = int_to_ptr.vmem [resolvable:$true] %s28
      %34 = dma.hbm_to_vmem [thread:$0]  %s27, 1024, %s29, [#allocation6], 64, 64, 4
    $region9: #{tpu_custom_call.1} parent=1 // pred_fallthru
      _
    // Predicated region
    $region10: #{tpu_custom_call.1} parent=1 // pred_check
      _
    $region11: #{tpu_custom_call.1} parent=1 // pred_check_branch
      %36 = sbr.rel (0) target = $region13
    $region12: #{tpu_custom_call.1} parent=1 // pred_region
      _
    $region13: #{tpu_custom_call.1} parent=1 // pred_fallthru
      _
    // Predicated region
    $region14: #{tpu_custom_call.1} parent=1 // pred_check
      _
    $region15: #{tpu_custom_call.1} parent=1 // pred_check_branch
      %38 = sbr.rel (0) target = $region17
    $region16: #{tpu_custom_call.1} parent=1 // pred_region
      %40 = dma.done [#allocation3], 64
    $region17: #{tpu_custom_call.1} parent=1 // pred_fallthru
      _
    // Predicated region
    $region18: #{tpu_custom_call.1} parent=1 // pred_check
      _
    $region19: #{tpu_custom_call.1} parent=1 // pred_check_branch
      %42 = sbr.rel (0) target = $region21
    $region20: #{tpu_custom_call.1} parent=1 // pred_region
      %44 = dma.done [#allocation6], 1024
    $region21: #{tpu_custom_call.1} parent=1 // pred_fallthru
      _
    %v45 = vld [vmem:[#allocation2] sm:$0xf]
    %v46 = vld [vmem:[#allocation5] sm:$0xf]
    %v47 = vld [vmem:[#allocation5 + $0x4] sm:$0xf]
    %v48 = vld [vmem:[#allocation5 + $0x8] sm:$0xf]
    %v49 = vld [vmem:[#allocation5 + $0xc] sm:$0xf]
    %v50 = vld [vmem:[#allocation5 + $0x10] sm:$0xf]
    %v51 = vld [vmem:[#allocation5 + $0x14] sm:$0xf]
    %v52 = vld [vmem:[#allocation5 + $0x18] sm:$0xf]
    %v53 = vld [vmem:[#allocation5 + $0x1c] sm:$0xf]
    %v54 = vld [vmem:[#allocation5 + $0x20] sm:$0xf]
    %v55 = vld [vmem:[#allocation5 + $0x24] sm:$0xf]
    %v56 = vld [vmem:[#allocation5 + $0x28] sm:$0xf]
    %v57 = vld [vmem:[#allocation5 + $0x2c] sm:$0xf]
    %v58 = vld [vmem:[#allocation5 + $0x30] sm:$0xf]
    %v59 = vld [vmem:[#allocation5 + $0x34] sm:$0xf]
    %v60 = vld [vmem:[#allocation5 + $0x38] sm:$0xf]
    %v61 = vld [vmem:[#allocation5 + $0x3c] sm:$0xf]
    %v78 = vunpack.c.l.b16 %v46
    %v79 = vunpack.c.l.b16 %v47
    %v80 = vunpack.c.l.b16 %v48
    %v81 = vunpack.c.l.b16 %v49
    %v82 = vunpack.c.l.b16 %v50
    %v83 = vunpack.c.l.b16 %v51
    %v84 = vunpack.c.l.b16 %v52
    %v85 = vunpack.c.l.b16 %v53
    %v86 = vunpack.c.l.b16 %v54
    %v87 = vunpack.c.l.b16 %v55
    %v88 = vunpack.c.l.b16 %v56
    %v89 = vunpack.c.l.b16 %v57
    %v90 = vunpack.c.l.b16 %v58
    %v91 = vunpack.c.l.b16 %v59
    %v92 = vunpack.c.l.b16 %v60
    %v93 = vunpack.c.l.b16 %v61
    %v94 = vpack.c.b16 %v79, %v78
    %v95 = vpack.c.b16 %v81, %v80
    %v96 = vpack.c.b16 %v83, %v82
    %v97 = vpack.c.b16 %v85, %v84
    %v98 = vpack.c.b16 %v87, %v86
    %v99 = vpack.c.b16 %v89, %v88
    %v100 = vpack.c.b16 %v91, %v90
    %v101 = vpack.c.b16 %v93, %v92
    %110 = vmatpush.bf16.msra.mxu0 %v101
    %111 = vmatpush.bf16.msra.mxu0 %v100
    %112 = vmatpush.bf16.msra.mxu0 %v99
    %113 = vmatpush.bf16.msra.mxu0 %v98
    %114 = vmatpush.bf16.msra.mxu0 %v97
    %115 = vmatpush.bf16.msra.mxu0 %v96
    %116 = vmatpush.bf16.msra.mxu0 %v95
    %117 = vmatpush.bf16.msra.mxu0 %v94
    %118 = vmatmul.bf16.gmra.mxu0 %v45
    %v119 = vpop.f32.mrf.mxu0
    %v120 = vadd.f32 0.0, %v119
    %v121 = vpop.f32.mrf.mxu0
    %122 = vdwg.mxu0
    %p123 = scmp.eq.s32.totalorder 0, 0
    // Predicated region
    $region22: #{tpu_custom_call.1} parent=1 // pred_check
      %p124 = pneg %p123
    $region23: #{tpu_custom_call.1} parent=1 // pred_check_branch
      %126 = sbr.rel (%p124) target = $region25
    $region24: #{tpu_custom_call.1} parent=1 // pred_region
      %v127 = vld [vmem:[%s2] sm:$0x1]
      %v129 = vperm.slane %v127, 0
      %v131 = vadd.f32 %v129, %v120
      %132 = vst [vmem:[#allocation7] sm:$0xff] %v131
    $region25: #{tpu_custom_call.1} parent=1 // pred_fallthru
      _
    %p133 = scmp.gt.s32.totalorder 0, 0
    // Predicated region
    $region26: #{tpu_custom_call.1} parent=1 // pred_check
      %p134 = pneg %p133
    $region27: #{tpu_custom_call.1} parent=1 // pred_check_branch
      %136 = sbr.rel (%p134) target = $region29
    $region28: #{tpu_custom_call.1} parent=1 // pred_region
      %v137 = vld [vmem:[#allocation7] sm:$0xff]
      %v138 = vadd.f32 %v137, %v120
      %139 = vst [vmem:[#allocation7] sm:$0xff] %v138
    $region29: #{tpu_custom_call.1} parent=1 // pred_fallthru
      _
    // Predicated region
    $region30: #{tpu_custom_call.1} parent=1 // pred_check
      _
    $region31: #{tpu_custom_call.1} parent=1 // pred_check_branch
      %141 = sbr.rel (0) target = $region33
    $region32: #{tpu_custom_call.1} parent=1 // pred_region
      %143 = vsyncadd [#allocation4], 0
      %s145 = sshll.u32 [#allocation7], 4
      %s146 = int_to_ptr.vmem [resolvable:$true] %s145
      %s147 = sshll.u32 %s3, 4
      %s148 = int_to_ptr.hbm [resolvable:$true] %s147
      %150 = dma.vmem_to_hbm [thread:$0]  %s146, 128, %s148, [#allocation4]
    $region33: #{tpu_custom_call.1} parent=1 // pred_fallthru
      _
    // Predicated region
    $region34: #{tpu_custom_call.1} parent=1 // pred_check
      _
    $region35: #{tpu_custom_call.1} parent=1 // pred_check_branch
      %152 = sbr.rel (0) target = $region37
    $region36: #{tpu_custom_call.1} parent=1 // pred_region
      %154 = dma.done [#allocation4], 128
    $region37: #{tpu_custom_call.1} parent=1 // pred_fallthru
      _
    %155 = vsyncpa [#allocation3], 1
    %156 = vsyncpa [#allocation6], 1
    %157 = vsyncpa [#allocation4], 1

</llo_original>
